<compile_context>
chip_gen: v6e
topology: v6e:2x2x1
jax: 0.10.0
libtpu: 0.0.40
codegen_flags: <defaults>
</compile_context>

<pallas_src>
import jax
import jax.numpy as jnp
from jax.experimental import pallas as pl
from jax.experimental.pallas import tpu as pltpu


def _round_up(x, m):
    return ((x + m - 1) // m) * m


def _sad_cos_kernel(x_ref, t_ref, cos_ref):
    # x_ref / t_ref: (bb, num_bands) VMEM tiles; cos_ref: (1, bb) output tile.
    x = x_ref[...].astype(jnp.float32)
    t = t_ref[...].astype(jnp.float32)
    # torch.sum(input.pow(2), dim=1), torch.sum(target.pow(2), dim=1),
    # torch.sum(input * target, dim=1); accumulate in f32.
    sum_xx = jnp.sum(x * x, axis=-1)          # (bb,)
    sum_tt = jnp.sum(t * t, axis=-1)          # (bb,)
    dot = jnp.sum(x * t, axis=-1)             # (bb,)
    # cos = dot / (sqrt(sum_xx + 1e-3) * sqrt(sum_tt + 1e-3)), fused as a
    # single EUP rsqrt (mathematically identical to the torch formulation).
    inv = jax.lax.rsqrt((sum_xx + 0.001) * (sum_tt + 0.001))
    cos_ref[...] = (dot * inv).reshape(cos_ref.shape)


def _tpu_config():
    """Best-effort (tensorcores_per_chip, input-tile VMEM budget in bytes)."""
    kind = ""
    try:
        kind = jax.devices()[0].device_kind.lower()
    except Exception:
        pass
    # v5e: only 16 MiB default scoped VMEM -> smaller budget.
    if ("v5 lite" in kind) or ("v5e" in kind) or ("v5lite" in kind):
        return 1, 10 * 1024 * 1024
    # v7x (2 TC/chip, 64 MiB VMEM per TC) and v4/v5p megacore (2 TCs).
    if ("v7" in kind) or ("tpu7" in kind) or ("v4" in kind) or ("v5p" in kind):
        return 2, 20 * 1024 * 1024
    # v6e and anything unknown: single TC, 128 MiB physical VMEM.
    return 1, 24 * 1024 * 1024


def _choose_block_batch(batch_padded8, num_bands, itemsize, num_cores,
                        vmem_budget_bytes, max_block=4096):
    """Largest multiple-of-8 batch tile that fits the VMEM budget."""
    lane_padded = _round_up(num_bands, 128)
    # Per tile row: 2 inputs x 2 pipeline buffers (input dtype) plus ~2 f32
    # upcast/product temporaries live inside the body.
    per_row_bytes = lane_padded * (2 * 2 * itemsize + 2 * 4)
    bb = max(8, ((vmem_budget_bytes // per_row_bytes) // 8) * 8)
    bb = min(bb, max_block, batch_padded8)
    if num_cores > 1 and batch_padded8 >= 16:
        # Multi-TensorCore chip: keep >= num_cores grid steps and round the
        # step count up to a multiple of num_cores so dimension_semantics
        # ("parallel",) megacore sharding gives every core equal work.
        n_steps = max(num_cores, pl.cdiv(batch_padded8, bb))
        n_steps = _round_up(n_steps, num_cores)
        bb = _round_up(pl.cdiv(batch_padded8, n_steps), 8)
    return bb


def sad_loss(inp, tgt, *, block_batch=None):
    """Spectral Angle Distance loss: mean(acos(<x,t> / (||x|| * ||t||))).

    Inputs may be f32 or bf16 (bf16 halves HBM traffic; the kernel upcasts
    each tile to f32 and accumulates in f32).
    """
    assert inp.shape == tgt.shape and inp.ndim == 2
    B, N = inp.shape
    Bp8 = _round_up(B, 8)
    itemsize = jnp.dtype(inp.dtype).itemsize
    num_cores, vmem_budget = _tpu_config()

    if block_batch is None:
        bb = _choose_block_batch(Bp8, N, itemsize, num_cores, vmem_budget)
    else:
        bb = min(_round_up(block_batch, 8), Bp8)

    grid = pl.cdiv(B, bb)  # ragged last block handled by Pallas edge masking

    # Deeper pipelining only pays off when tiles are small and there are many
    # of them (large num_bands forcing ~128-256-row tiles).
    n_buf = 3 if (bb <= 256 and grid >= 4) else 2
    if n_buf == 2:
        in_specs = [pl.BlockSpec((bb, N), lambda i: (i, 0)),
                    pl.BlockSpec((bb, N), lambda i: (i, 0))]
    else:
        in_specs = [pl.BlockSpec((bb, N), lambda i: (i, 0),
                                 pipeline_mode=pl.Buffered(n_buf)),
                    pl.BlockSpec((bb, N), lambda i: (i, 0),
                                 pipeline_mode=pl.Buffered(n_buf))]

    # Explicit scoped-VMEM limit sized from the actual tile footprint
    # (inputs x buffers + f32 temporaries) plus slack; safe on all chips.
    lane_padded = _round_up(N, 128)
    vmem_needed = bb * lane_padded * (2 * n_buf * itemsize + 2 * 4) + (2 << 20)
    vmem_limit = int(min(max(vmem_needed, 16 << 20), 48 << 20))

    # Lane-dense output: row t of the (grid, bb) array holds cos for input
    # rows [t*bb, (t+1)*bb); garbage rows (>= B) land only in the tail.
    cos = pl.pallas_call(
        _sad_cos_kernel,
        out_shape=jax.ShapeDtypeStruct((grid, bb), jnp.float32),
        grid_spec=pltpu.PrefetchScalarGridSpec(
            num_scalar_prefetch=0,
            grid=(grid,),
            in_specs=in_specs,
            out_specs=pl.BlockSpec((1, bb), lambda i: (i, 0)),
        ),
        compiler_params=pltpu.CompilerParams(
            dimension_semantics=("parallel",),
            vmem_limit_bytes=vmem_limit,
        ),
    )(inp, tgt)

    # Slice the valid rows BEFORE arccos/mean so masked-edge garbage can never
    # contaminate the result.  No clamping of cos (parity with torch.acos:
    # |cos| > 1 from rounding gives NaN, same as PyTorch).
    angle = jnp.arccos(cos.reshape(-1)[:B])
    return jnp.mean(angle)


def _sad_loss_ref(inp, tgt):
    """Pure-JAX reference mirroring the PyTorch module."""
    x = inp.astype(jnp.float32)
    t = tgt.astype(jnp.float32)
    input_norm = jnp.sqrt(jnp.sum(x ** 2, axis=1) + 0.001)
    target_norm = jnp.sqrt(jnp.sum(t ** 2, axis=1) + 0.001)
    summation = jnp.sum(x * t, axis=1)
    cos = summation / (input_norm * target_norm)
    return jnp.mean(jnp.arccos(cos))


if __name__ == "__main__":
    key = jax.random.PRNGKey(0)
    ks = jax.random.split(key, 8)
    num_bands = 156

    # (1) Small batch, single exact tile.
    B1 = 8
    a = jax.random.uniform(ks[0], (B1, num_bands), dtype=jnp.float32)
    b = jax.random.uniform(ks[1], (B1, num_bands), dtype=jnp.float32)
    out1 = sad_loss(a, b)
    jax.block_until_ready(out1)
    ref1 = _sad_loss_ref(a, b)
    assert jnp.allclose(out1, ref1, rtol=1e-5, atol=1e-5), (out1, ref1)

    # (2) Batch not a multiple of 8 -> ragged (masked) edge block, no padding
    #     copies in the wrapper.
    B2 = 100
    a = jax.random.uniform(ks[2], (B2, num_bands), dtype=jnp.float32)
    b = jax.random.uniform(ks[3], (B2, num_bands), dtype=jnp.float32)
    out2 = sad_loss(a, b)
    jax.block_until_ready(out2)
    ref2 = _sad_loss_ref(a, b)
    assert jnp.allclose(out2, ref2, rtol=1e-5, atol=1e-5), (out2, ref2)

    # (3) Forced small tile -> multiple grid steps + ragged last block.
    B3 = 40
    a = jax.random.uniform(ks[4], (B3, num_bands), dtype=jnp.float32)
    b = jax.random.uniform(ks[5], (B3, num_bands), dtype=jnp.float32)
    out3 = sad_loss(a, b, block_batch=16)
    jax.block_until_ready(out3)
    ref3 = _sad_loss_ref(a, b)
    assert jnp.allclose(out3, ref3, rtol=1e-5, atol=1e-5), (out3, ref3)

    # (4) bf16 inputs (halves HBM traffic; kernel accumulates in f32).
    B4 = 64
    a = jax.random.uniform(ks[6], (B4, num_bands), dtype=jnp.float32).astype(jnp.bfloat16)
    b = jax.random.uniform(ks[7], (B4, num_bands), dtype=jnp.float32).astype(jnp.bfloat16)
    out4 = sad_loss(a, b)
    jax.block_until_ready(out4)
    ref4 = _sad_loss_ref(a, b)
    assert jnp.allclose(out4, ref4, rtol=1e-4, atol=1e-4), (out4, ref4)

    print("KERNEL_OK")
</pallas_src>

<mosaic_0001>
module attributes {stable_mosaic.version = 11 : i64} {
  func.func @_sad_cos_kernel(%arg0: i32, %arg1: memref<8x156xf32, #tpu.memory_space<vmem>>, %arg2: memref<8x156xf32, #tpu.memory_space<vmem>>, %arg3: memref<1x8xf32, #tpu.memory_space<vmem>>) attributes {dimension_semantics = [#tpu.dimension_semantics<parallel>], iteration_bounds = array<i64: 1>, scalar_prefetch = 0 : i64, scratch_operands = 0 : i64, tpu.core_type = #tpu.core_type<tc>, window_params = [{transform_indices = @transform_0, window_bounds = array<i64: 8, 156>}, {transform_indices = @transform_1, window_bounds = array<i64: 8, 156>}, {transform_indices = @transform_2, window_bounds = array<i64: 1, 8>}]} {
    %c0 = arith.constant 0 : index
    %c0_0 = arith.constant 0 : index
    %0 = vector.load %arg1[%c0, %c0_0] : memref<8x156xf32, #tpu.memory_space<vmem>>, vector<8x156xf32>
    %c0_1 = arith.constant 0 : index
    %c0_2 = arith.constant 0 : index
    %1 = vector.load %arg2[%c0_1, %c0_2] : memref<8x156xf32, #tpu.memory_space<vmem>>, vector<8x156xf32>
    %2 = arith.mulf %0, %0 : vector<8x156xf32>
    %cst = arith.constant dense<0.000000e+00> : vector<8xf32>
    %3 = vector.multi_reduction <add>, %2, %cst [1] : vector<8x156xf32> to vector<8xf32>
    %4 = arith.mulf %1, %1 : vector<8x156xf32>
    %cst_3 = arith.constant dense<0.000000e+00> : vector<8xf32>
    %5 = vector.multi_reduction <add>, %4, %cst_3 [1] : vector<8x156xf32> to vector<8xf32>
    %6 = arith.mulf %0, %1 : vector<8x156xf32>
    %cst_4 = arith.constant dense<0.000000e+00> : vector<8xf32>
    %7 = vector.multi_reduction <add>, %6, %cst_4 [1] : vector<8x156xf32> to vector<8xf32>
    %cst_5 = arith.constant 1.000000e-03 : f32
    %8 = vector.broadcast %cst_5 : f32 to vector<8xf32>
    %9 = arith.addf %3, %8 : vector<8xf32>
    %cst_6 = arith.constant 1.000000e-03 : f32
    %10 = vector.broadcast %cst_6 : f32 to vector<8xf32>
    %11 = arith.addf %5, %10 : vector<8xf32>
    %12 = arith.mulf %9, %11 : vector<8xf32>
    %13 = math.rsqrt %12 : vector<8xf32>
    %14 = arith.mulf %7, %13 : vector<8xf32>
    %15 = vector.shape_cast %14 : vector<8xf32> to vector<1x8xf32>
    %c0_7 = arith.constant 0 : index
    %c0_8 = arith.constant 0 : index
    %16 = vector.load %arg3[%c0_7, %c0_8] : memref<1x8xf32, #tpu.memory_space<vmem>>, vector<1x8xf32>
    tpu.vector_store %arg3[%c0_7, %c0_8], %15 {strides = array<i32>} : memref<1x8xf32, #tpu.memory_space<vmem>>, vector<1x8xf32>,
    return
  }
  func.func @transform_0(%arg0: i32) -> (i32, i32) {
    %c0_i32 = arith.constant 0 : i32
    %c0_i32_0 = arith.constant 0 : i32
    return %arg0, %c0_i32 : i32, i32
  }
  func.func @transform_1(%arg0: i32) -> (i32, i32) {
    %c0_i32 = arith.constant 0 : i32
    %c0_i32_0 = arith.constant 0 : i32
    return %arg0, %c0_i32 : i32, i32
  }
  func.func @transform_2(%arg0: i32) -> (i32, i32) {
    %c0_i32 = arith.constant 0 : i32
    %c0_i32_0 = arith.constant 0 : i32
    return %arg0, %c0_i32 : i32, i32
  }
}

</mosaic_0001>

<llo_original>
// kernel: tpu_custom_call.1
$region0: #{tpu_custom_call.1}
  #allocation0 [shape = 'u32[]', space=smem, size = 0x4, offset = 0x4, fixed_abs, tag = 'smem constant byte address 0x4 - core index']
  #allocation1 [shape = 'u32[144,128]{1,0:T(1,128)}', space=vmem, size = 0x12000, scoped, tag = 'internal scratch']
  %s0 = inlined_call_operand.hbm [shape: f32[8,156], index: 0, kind: input, shape index: {}]
  %s1 = inlined_call_operand.hbm [shape: f32[8,156], index: 1, kind: input, shape index: {}]
  %s2 = inlined_call_operand.hbm [shape: f32[1,8], index: 2, kind: output, shape index: {}]
  %s3 = sld [smem:[#allocation0]]
  $region26: #{tpu_custom_call.1} parent=0
    _
  %s5 = ssub.s32 1, %s3
  %s6 = scalar_select 0, %s5, %s3
  $region1: #{tpu_custom_call.1} parent=0
    #allocation2 [shape = 'u8[8192]{0}', space=vmem, size = 0x2000, scoped, tag = 'input window, operand 0, single buffered']
    #allocation3 [shape = 's32[1]{0}', space=sflag, size = 0x4, scoped, tag = 'scoped memory for tpu_custom_call.1']
    #allocation4 [shape = 's32[1]{0}', space=sflag, size = 0x4, scoped, tag = 'scoped memory for tpu_custom_call.1']
    #allocation5 [shape = 'u8[8192]{0}', space=vmem, size = 0x2000, scoped, tag = 'input window, operand 1, single buffered']
    #allocation6 [shape = 's32[1]{0}', space=sflag, size = 0x4, scoped, tag = 'scoped memory for tpu_custom_call.1']
    #allocation7 [shape = 'u8[512]{0}', space=vmem, size = 0x400, scoped, tag = 'output window, operand 0, single buffered']
    %7 = vsyncpa [#allocation3], 0
    %8 = vsyncpa [#allocation6], 0
    %9 = vsyncpa [#allocation4], 0
    // Predicated region
    $region2: #{tpu_custom_call.1} parent=1 // pred_check
      _
    $region3: #{tpu_custom_call.1} parent=1 // pred_check_branch
      %11 = sbr.rel (0) target = $region5
    $region4: #{tpu_custom_call.1} parent=1 // pred_region
      %s13 = ssub.s32 256, 256
      %14 = vsyncadd [#allocation3], %s13
      %s16 = sshll.u32 [#allocation2], 4
      %s17 = int_to_ptr.vmem [resolvable:$true] %s16
      %19 = dma.hbm_to_vmem [thread:$0]  %s0, 256, %s17, [#allocation3]
    $region5: #{tpu_custom_call.1} parent=1 // pred_fallthru
      _
    // Predicated region
    $region6: #{tpu_custom_call.1} parent=1 // pred_check
      _
    $region7: #{tpu_custom_call.1} parent=1 // pred_check_branch
      %21 = sbr.rel (0) target = $region9
    $region8: #{tpu_custom_call.1} parent=1 // pred_region
      %s23 = ssub.s32 256, 256
      %24 = vsyncadd [#allocation6], %s23
      %s26 = sshll.u32 [#allocation5], 4
      %s27 = int_to_ptr.vmem [resolvable:$true] %s26
      %29 = dma.hbm_to_vmem [thread:$0]  %s1, 256, %s27, [#allocation6]
    $region9: #{tpu_custom_call.1} parent=1 // pred_fallthru
      _
    // Predicated region
    $region10: #{tpu_custom_call.1} parent=1 // pred_check
      _
    $region11: #{tpu_custom_call.1} parent=1 // pred_check_branch
      %31 = sbr.rel (0) target = $region13
    $region12: #{tpu_custom_call.1} parent=1 // pred_region
      %32 = dma.done [#allocation3], 256
    $region13: #{tpu_custom_call.1} parent=1 // pred_fallthru
      _
    // Predicated region
    $region14: #{tpu_custom_call.1} parent=1 // pred_check
      _
    $region15: #{tpu_custom_call.1} parent=1 // pred_check_branch
      %34 = sbr.rel (0) target = $region17
    $region16: #{tpu_custom_call.1} parent=1 // pred_region
      %35 = dma.done [#allocation6], 256
    $region17: #{tpu_custom_call.1} parent=1 // pred_fallthru
      _
    %v36 = vld [vmem:[#allocation2] sm:$0xff]
    %v37 = vld [vmem:[#allocation2 + $0x8] sm:$0xff]
    %v38 = vld [vmem:[#allocation5] sm:$0xff]
    %v39 = vld [vmem:[#allocation5 + $0x8] sm:$0xff]
    %v40 = vmul.f32 %v36, %v36
    %v41 = vmul.f32 %v37, %v37
    %vm42 = vcmask 228352
    %v43 = vsel %vm42, %v41, 0.0
    %v44 = vadd.f32 %v40, %v43
    %45 = vadd.xlane.f32.xlu0 %v44
    %v46 = vpop.xlane.xlu0 %45
    %v47 = vmul.f32 %v38, %v38
    %v48 = vmul.f32 %v39, %v39
    %v49 = vsel %vm42, %v48, 0.0
    %v50 = vadd.f32 %v47, %v49
    %51 = vadd.xlane.f32.xlu0 %v50
    %v52 = vpop.xlane.xlu0 %51
    %v53 = vmul.f32 %v36, %v38
    %v54 = vmul.f32 %v37, %v39
    %v55 = vsel %vm42, %v54, 0.0
    %v56 = vadd.f32 %v53, %v55
    %57 = vadd.xlane.f32.xlu0 %v56
    %v58 = vpop.xlane.xlu0 %57
    %v59 = vadd.f32 %v46, 0.001
    %v60 = vadd.f32 %v52, 0.001
    %v61 = vmul.f32 %v59, %v60
    %v62 = vrsqrt.pop %v61
    %v63 = vmul.f32 %v58, %v62
    %v65 = vlaneseq
    %v66 = vand.u32 %v65, 127
    %v67 = vlaneseq
    %v68 = vshrl.u32 %v67, 7
    %v69 = vsub.s32 %v66, %v68
    %v70 = vrot.slane %v63, %v69
    %vm72 = vcmask 57344
    %73 = vst.msk [vmem:[#allocation7] sm:$0x1] %vm72, %v70
    // Predicated region
    $region18: #{tpu_custom_call.1} parent=1 // pred_check
      _
    $region19: #{tpu_custom_call.1} parent=1 // pred_check_branch
      %75 = sbr.rel (0) target = $region21
    $region20: #{tpu_custom_call.1} parent=1 // pred_region
      %s77 = ssub.s32 16, 16
      %78 = vsyncadd [#allocation4], %s77
      %s80 = sshll.u32 [#allocation7], 4
      %s81 = int_to_ptr.vmem [resolvable:$true] %s80
      %83 = dma.vmem_to_hbm [thread:$0]  %s81, 16, %s2, [#allocation4]
    $region21: #{tpu_custom_call.1} parent=1 // pred_fallthru
      _
    // Predicated region
    $region22: #{tpu_custom_call.1} parent=1 // pred_check
      _
    $region23: #{tpu_custom_call.1} parent=1 // pred_check_branch
      %85 = sbr.rel (0) target = $region25
    $region24: #{tpu_custom_call.1} parent=1 // pred_region
      %86 = dma.done [#allocation4], 16
    $region25: #{tpu_custom_call.1} parent=1 // pred_fallthru
      _
    %87 = vsyncpa [#allocation3], 1
    %88 = vsyncpa [#allocation6], 1
    %89 = vsyncpa [#allocation4], 1

</llo_original>
